<compile_context>
chip_gen: v7x
topology: tpu7x:2x2x1
jax: 0.10.0
libtpu: 0.0.40
codegen_flags: <defaults>
</compile_context>

<pallas_src>
import math

import jax
import jax.numpy as jnp
from jax.experimental import pallas as pl
from jax.experimental.pallas import tpu as pltpu

LN_EPS = 1e-5  # torch.nn.LayerNorm default eps
_MIB = 1024 * 1024


def _layernorm(x, gamma, beta):
    # torch.nn.LayerNorm over the last dim (biased variance, eps=1e-5, affine); f32 math.
    x = x.astype(jnp.float32)
    mu = jnp.mean(x, axis=-1, keepdims=True)
    xc = x - mu
    var = jnp.mean(xc * xc, axis=-1, keepdims=True)
    inv = jax.lax.rsqrt(var + LN_EPS)
    return xc * inv * gamma.astype(jnp.float32) + beta.astype(jnp.float32)


# ---------------------------------------------------------------------------
# VMEM budget + tile selection (per-generation instead of a universal clamp)
# ---------------------------------------------------------------------------
def _vmem_budget_bytes():
    cap = 64 * _MIB                      # conservative default (v7x physical VMEM)
    try:
        info = pltpu.get_tpu_info()
        c = getattr(info, "vmem_capacity_bytes", None)
        if c:
            cap = int(c)
    except Exception:
        pass
    # Leave headroom for Mosaic-internal scratch: ~90 MiB on 128-MiB v5e/v6e,
    # ~45 MiB on 64-MiB v7x.
    return max(32 * _MIB, int(cap * 0.70))


def _cparams(semantics, limit_bytes):
    return pltpu.CompilerParams(dimension_semantics=semantics,
                                vmem_limit_bytes=int(limit_bytes))


def _row_tile_options(n, max_tile):
    opts = [n] if n <= max_tile else []
    opts += [t for t in (1024, 512, 256, 128, 64, 32, 16, 8) if t <= max_tile and t < n]
    return opts or [n]


def _pick_qkv_tiles(n, d, a_isz, w_isz, v_isz, budget):
    def fp(tr, tc):
        blocks = 2 * a_isz * 3 * tr * d                    # q/k/v input row blocks
        blocks += 2 * w_isz * 3 * d * tc                   # wq/wk/wv column blocks
        blocks += 2 * (2 * a_isz + v_isz) * tr * tc        # q/k/v output blocks
        live = 3 * 4 * tr * tc                             # f32 dot results pre-cast
        return blocks + live

    tc_opts = [d] + [t for t in (2048, 1024, 512, 256, 128) if t < d and d % t == 0]
    tr_opts = _row_tile_options(n, 1024 if d <= 1024 else 512)
    for tr in tr_opts:
        for tc in tc_opts:
            if fp(tr, tc) <= budget:
                return tr, tc
    return tr_opts[-1], tc_opts[-1]


def _pick_attn_tiles(s, h, dph, a_isz, v_isz, budget):
    opts = ([s] if s <= 1024 else []) + [
        t for t in (512, 256, 128, 64, 32, 16, 8) if t < s and s % t == 0]
    if not opts:
        opts = [s]          # no aligned divisor of S: fall back to the full sequence

    def fp(tq, tk):
        blocks = 2 * a_isz * 2 * h * tq * dph              # q + o blocks
        blocks += 2 * (a_isz + v_isz) * h * tk * dph       # k + v blocks
        scratch = 4 * h * tq * (dph + 2)                   # acc + m + l (f32)
        live = 10 * h * tq * tk + 8 * h * tq * dph         # scores/p/exp temporaries
        return blocks + scratch + live

    for tq in opts:                                        # prefer large q tile,
        for tk in opts:                                    # shrink kv tile first
            if fp(tq, tk) <= budget:
                return tq, tk
    return opts[-1], opts[-1]


def _pick_post_tiles(n, d, f, a_isz, w_isz, mm_isz, budget):
    def fp(tr, tf):
        blocks = 2 * a_isz * (3 * tr * d + 4 * d)          # attn/qin/out rows + LN params
        blocks += 2 * w_isz * d * d                        # restore weight
        blocks += 2 * mm_isz * 2 * d * tf                  # w1 + w2 hidden tiles
        scratch = tr * d * (4 + 4 + mm_isz)                # x_scr + acc (f32) + xmm (bf16)
        live = 4 * tr * tf + 12 * tr * d                   # h (f32) + LN temporaries
        return blocks + scratch + live

    # Prefer tf == F (weights resident across the row loop); shrink tf before tr.
    tf_opts = [f] + [t for t in (2048, 1024, 512, 256) if t < f and f % t == 0]
    tr_opts = _row_tile_options(n, 1024 if d <= 1024 else 512)
    for tr in tr_opts:
        for tf in tf_opts:
            if fp(tr, tf) <= budget:
                return tr, tf
    return tr_opts[-1], tf_opts[-1]


# ---------------------------------------------------------------------------
# Kernel 1: Q/K/V projections (bias-free), row x output-column tiled.
# ---------------------------------------------------------------------------
def _qkv_kernel(q_ref, k_ref, v_ref, wq_ref, wk_ref, wv_ref,
                qo_ref, ko_ref, vo_ref):
    qo_ref[...] = jnp.dot(q_ref[...], wq_ref[...],
                          preferred_element_type=jnp.float32).astype(qo_ref.dtype)
    ko_ref[...] = jnp.dot(k_ref[...], wk_ref[...],
                          preferred_element_type=jnp.float32).astype(ko_ref.dtype)
    vo_ref[...] = jnp.dot(v_ref[...], wv_ref[...],
                          preferred_element_type=jnp.float32).astype(vo_ref.dtype)


# ---------------------------------------------------------------------------
# Kernel 2: flash-style online-softmax attention over the module's head groups.
# Grid = (batch, q-tile, kv-tile); kv-tile is the "arbitrary" accumulation axis.
# ---------------------------------------------------------------------------
def _attn_kernel(q_ref, k_ref, v_ref, o_ref, m_scr, l_scr, acc_scr):
    ki = pl.program_id(2)

    @pl.when(ki == 0)
    def _init():
        m_scr[...] = jnp.full_like(m_scr, -jnp.inf)
        l_scr[...] = jnp.zeros_like(l_scr)
        acc_scr[...] = jnp.zeros_like(acc_scr)

    # 1/sqrt(d_k) already folded into Wq, so scores arrive pre-scaled.
    s = jnp.einsum('gtd,gsd->gts', q_ref[...], k_ref[...],
                   preferred_element_type=jnp.float32)
    m_prev = m_scr[...]
    m_new = jnp.maximum(m_prev, jnp.max(s, axis=-1, keepdims=True))
    alpha = jnp.exp(m_prev - m_new)                       # 0 on the first kv tile
    p = jnp.exp(s - m_new)
    l_scr[...] = alpha * l_scr[...] + jnp.sum(p, axis=-1, keepdims=True)
    acc_scr[...] = alpha * acc_scr[...] + jnp.einsum(
        'gts,gsd->gtd', p.astype(v_ref.dtype), v_ref[...],
        preferred_element_type=jnp.float32)
    m_scr[...] = m_new

    @pl.when(ki == pl.num_programs(2) - 1)
    def _finalize():
        # Exact divide (not the approx EUP reciprocal) keeps the softmax bit-accurate.
        o_ref[...] = (acc_scr[...] / l_scr[...]).astype(o_ref.dtype)


# ---------------------------------------------------------------------------
# Kernel 3: restore + residual + LN, then FFN (hidden dim tiled, f32 accumulator)
#           + residual + LN.
# ---------------------------------------------------------------------------
def _post_kernel(attn_ref, qin_ref, wr_ref, g1_ref, b1_ref,
                 w1_ref, w2_ref, g2_ref, b2_ref, o_ref,
                 x_scr, xmm_scr, acc_scr):
    f = pl.program_id(1)

    @pl.when(f == 0)
    def _init():
        # MultiHeadAttention tail: restore -> dropout(p=0, identity) -> +queries -> LN
        x = jnp.dot(attn_ref[...], wr_ref[...], preferred_element_type=jnp.float32)
        x = x + qin_ref[...].astype(jnp.float32)
        xn = _layernorm(x, g1_ref[...], b1_ref[...])
        x_scr[...] = xn                                    # f32 copy for the residual
        xmm_scr[...] = xn.astype(xmm_scr.dtype)            # one-time bf16 cast for w1
        acc_scr[...] = jnp.zeros_like(acc_scr)

    # FeedForward: Linear(D,4D) -> ReLU -> Linear(4D,D), hidden dim streamed in tiles.
    h = jnp.dot(xmm_scr[...], w1_ref[...], preferred_element_type=jnp.float32)
    h = jnp.maximum(h, 0.0)
    acc_scr[...] += jnp.dot(h.astype(w2_ref.dtype), w2_ref[...],
                            preferred_element_type=jnp.float32)

    @pl.when(f == pl.num_programs(1) - 1)
    def _finalize():
        o_ref[...] = _layernorm(x_scr[...] + acc_scr[...],
                                g2_ref[...], b2_ref[...]).astype(o_ref.dtype)


# ---------------------------------------------------------------------------
# Wrapper
# ---------------------------------------------------------------------------
def transform_block_pallas(params, queries, keys, values):
    B, S, D = queries.shape
    H = int(params['num_heads'])
    assert D % H == 0, "dimension must be divisible by num_heads"
    dph = D // H
    F = params['w1'].shape[1]
    N = B * S
    G = B * H

    in_dtype = queries.dtype
    a_isz = jnp.dtype(in_dtype).itemsize
    # Second-stage MXU operands (softmax probs / V, FFN activations / w1 / w2) run in
    # bf16 with f32 accumulation (f32xf32 MXU decomposes into multiple bf16 passes).
    mm_dtype = jnp.bfloat16
    mm_isz = jnp.dtype(mm_dtype).itemsize
    # First-stage weights (Q/K/V projections, restore) follow the input dtype to keep
    # pre-softmax scores and the residual path accurate (bf16 end-to-end for bf16 in).
    w_dtype = in_dtype
    w_isz = jnp.dtype(w_dtype).itemsize

    budget = _vmem_budget_bytes()

    # ---- host-side (free) prep: fold softmax scale into Wq, 2-D LN params ----
    # The torch module uses d_k = Q.shape[2] * 8 (a hard-coded 8, kept faithfully).
    d_k = dph * 8
    wq_s = (params['wq'].astype(jnp.float32) * (1.0 / math.sqrt(d_k))).astype(w_dtype)
    wk = params['wk'].astype(w_dtype)
    wv = params['wv'].astype(w_dtype)
    wr = params['wr'].astype(w_dtype)
    w1 = params['w1'].astype(mm_dtype)
    w2 = params['w2'].astype(mm_dtype)
    g1 = params['g1'].reshape(1, D).astype(jnp.float32)
    b1 = params['b1'].reshape(1, D).astype(jnp.float32)
    g2 = params['g2'].reshape(1, D).astype(jnp.float32)
    b2 = params['b2'].reshape(1, D).astype(jnp.float32)

    q2 = queries.reshape(N, D)
    k2 = keys.reshape(N, D)
    v2 = values.reshape(N, D)

    # ------------------------------ kernel 1: QKV -----------------------------
    tr1, tc = _pick_qkv_tiles(N, D, a_isz, w_isz, mm_isz, budget)
    grid_r1, grid_c = pl.cdiv(N, tr1), pl.cdiv(D, tc)
    row_in = pl.BlockSpec((tr1, D), lambda i, c: (i, 0))
    w_col = pl.BlockSpec((D, tc), lambda i, c: (0, c))
    out_col = pl.BlockSpec((tr1, tc), lambda i, c: (i, c))
    w_reads = grid_r1 if grid_c > 1 else 1
    Q, K, V = pl.pallas_call(
        _qkv_kernel,
        grid=(grid_r1, grid_c),
        in_specs=[row_in, row_in, row_in, w_col, w_col, w_col],
        out_specs=[out_col, out_col, out_col],
        out_shape=[jax.ShapeDtypeStruct((N, D), in_dtype),
                   jax.ShapeDtypeStruct((N, D), in_dtype),
                   jax.ShapeDtypeStruct((N, D), mm_dtype)],   # V feeds the bf16 PV matmul
        compiler_params=_cparams(("parallel", "parallel"), budget),
        cost_estimate=pl.CostEstimate(
            flops=int(2 * 3 * N * D * D),
            transcendentals=0,
            bytes_accessed=int(a_isz * 5 * N * D + mm_isz * N * D
                               + w_isz * 3 * D * D * w_reads)),
    )(q2, k2, v2, wq_s, wk, wv)

    # torch .view(batch*num_heads, -1, dim_prehead): free row-major metadata reshape.
    Qh = Q.reshape(G, -1, dph)
    Kh = K.reshape(G, -1, dph)
    Vh = V.reshape(G, -1, dph)
    T = Qh.shape[1]                     # == S whenever D == H * dph

    # --------------------------- kernel 2: attention --------------------------
    tq, tk = _pick_attn_tiles(T, H, dph, a_isz, mm_isz, budget)
    nq, nk = pl.cdiv(T, tq), pl.cdiv(T, tk)
    q_spec = pl.BlockSpec((H, tq, dph), lambda b, qi, ki: (b, qi, 0))
    kv_spec = pl.BlockSpec((H, tk, dph), lambda b, qi, ki: (b, ki, 0))
    o_spec = pl.BlockSpec((H, tq, dph), lambda b, qi, ki: (b, qi, 0))
    attn = pl.pallas_call(
        _attn_kernel,
        grid=(B, nq, nk),
        in_specs=[q_spec, kv_spec, kv_spec],
        out_specs=o_spec,
        out_shape=jax.ShapeDtypeStruct((G, T, dph), in_dtype),
        scratch_shapes=[pltpu.VMEM((H, tq, 1), jnp.float32),     # running max
                        pltpu.VMEM((H, tq, 1), jnp.float32),     # running denom
                        pltpu.VMEM((H, tq, dph), jnp.float32)],  # output accumulator
        compiler_params=_cparams(("parallel", "parallel", "arbitrary"), budget),
        cost_estimate=pl.CostEstimate(
            flops=int(4 * G * T * T * dph),
            transcendentals=int(G * T * T + G * T),
            bytes_accessed=int(a_isz * (2 * G * T * dph + nq * G * T * dph)
                               + mm_isz * nq * G * T * dph)),
    )(Qh, Kh, Vh)

    # torch .view(batch, -1, dim_prehead * num_heads): free metadata reshape back.
    attn_m = attn.reshape(N, D)

    # --------------- kernel 3: restore + LN + FFN (hidden tiled) + LN ---------
    tr, tf = _pick_post_tiles(N, D, F, a_isz, w_isz, mm_isz, budget)
    grid_r, grid_f = pl.cdiv(N, tr), pl.cdiv(F, tf)
    ffn_reads = grid_r if grid_f > 1 else 1
    out2 = pl.pallas_call(
        _post_kernel,
        grid=(grid_r, grid_f),
        in_specs=[
            pl.BlockSpec((tr, D), lambda i, f: (i, 0)),   # attention output (merged)
            pl.BlockSpec((tr, D), lambda i, f: (i, 0)),   # queries (residual)
            pl.BlockSpec((D, D), lambda i, f: (0, 0)),    # restore weight
            pl.BlockSpec((1, D), lambda i, f: (0, 0)),    # LN1 gamma
            pl.BlockSpec((1, D), lambda i, f: (0, 0)),    # LN1 beta
            pl.BlockSpec((D, tf), lambda i, f: (0, f)),   # FFN w1 (hidden-tiled, bf16)
            pl.BlockSpec((tf, D), lambda i, f: (f, 0)),   # FFN w2 (hidden-tiled, bf16)
            pl.BlockSpec((1, D), lambda i, f: (0, 0)),    # LN2 gamma
            pl.BlockSpec((1, D), lambda i, f: (0, 0)),    # LN2 beta
        ],
        out_specs=pl.BlockSpec((tr, D), lambda i, f: (i, 0)),
        out_shape=jax.ShapeDtypeStruct((N, D), in_dtype),
        scratch_shapes=[pltpu.VMEM((tr, D), jnp.float32),   # post-attention LN output (f32)
                        pltpu.VMEM((tr, D), mm_dtype),      # bf16 copy for the w1 matmul
                        pltpu.VMEM((tr, D), jnp.float32)],  # FFN accumulator
        compiler_params=_cparams(("parallel", "arbitrary"), budget),
        cost_estimate=pl.CostEstimate(
            flops=int(2 * N * D * D + 4 * N * D * F + 20 * N * D),
            transcendentals=int(2 * N),
            bytes_accessed=int(a_isz * (3 * N * D + 4 * D) + w_isz * D * D
                               + mm_isz * 2 * D * F * ffn_reads)),
    )(attn_m, q2, wr, g1, b1, w1, w2, g2, b2)

    return out2.reshape(B, S, D)


# ---------------- pure-JAX reference (for correctness check only) ----------------
def transform_block_ref(params, queries, keys, values):
    B, S, D = queries.shape
    H = int(params['num_heads'])
    dph = D // H
    Q = queries @ params['wq']
    K = keys @ params['wk']
    V = values @ params['wv']
    Qh = Q.reshape(B * H, -1, dph)
    Kh = K.reshape(B * H, -1, dph)
    Vh = V.reshape(B * H, -1, dph)
    d_k = dph * 8
    s = jnp.einsum('gtd,gsd->gts', Qh, Kh) / math.sqrt(d_k)
    p = jax.nn.softmax(s, axis=-1)
    o = jnp.einsum('gts,gsd->gtd', p, Vh).reshape(B, -1, dph * H)
    o = o @ params['wr'] + queries
    o = _layernorm(o, params['g1'], params['b1'])
    f = jnp.maximum(o @ params['w1'], 0.0) @ params['w2']
    return _layernorm(o + f, params['g2'], params['b2'])


def init_params(key, dim, num_heads=8):
    ks = jax.random.split(key, 6)
    s = 1.0 / math.sqrt(dim)
    return {
        'num_heads': num_heads,
        'wq': jax.random.normal(ks[0], (dim, dim), jnp.float32) * s,
        'wk': jax.random.normal(ks[1], (dim, dim), jnp.float32) * s,
        'wv': jax.random.normal(ks[2], (dim, dim), jnp.float32) * s,
        'wr': jax.random.normal(ks[3], (dim, dim), jnp.float32) * s,
        'w1': jax.random.normal(ks[4], (dim, 4 * dim), jnp.float32) * s,
        'w2': jax.random.normal(ks[5], (4 * dim, dim), jnp.float32) * (1.0 / math.sqrt(4 * dim)),
        # LayerNorm affine params (PyTorch default init: ones / zeros)
        'g1': jnp.ones((dim,), jnp.float32),
        'b1': jnp.zeros((dim,), jnp.float32),
        'g2': jnp.ones((dim,), jnp.float32),
        'b2': jnp.zeros((dim,), jnp.float32),
    }


if __name__ == "__main__":
    B, S, D, H = 2, 8, 32, 8   # dim_prehead = 4
    key = jax.random.PRNGKey(0)
    kq, kk, kv, kp = jax.random.split(key, 4)
    queries = jax.random.normal(kq, (B, S, D), jnp.float32)
    keys = jax.random.normal(kk, (B, S, D), jnp.float32)
    values = jax.random.normal(kv, (B, S, D), jnp.float32)
    params = init_params(kp, D, H)

    out = jax.block_until_ready(transform_block_pallas(params, queries, keys, values))
    ref = transform_block_ref(params, queries, keys, values)

    assert out.shape == (B, S, D) and out.dtype == queries.dtype
    err = float(jnp.max(jnp.abs(out - ref)))
    # Tolerance covers the bf16 second-stage MXU operands (softmax probs / V, FFN
    # activations / w1 / w2); scores, softmax (exact divide), LayerNorms and the
    # residual path are f32, so a real bug would show up as an O(1) error.
    if err > 5e-2:
        raise AssertionError(f"Pallas output mismatch vs reference, max abs err = {err}")
    print("KERNEL_OK")
</pallas_src>

<mosaic_0001>
module attributes {stable_mosaic.version = 11 : i64} {
  func.func @_qkv_kernel(%arg0: i32, %arg1: i32, %arg2: memref<16x32xf32, #tpu.memory_space<vmem>>, %arg3: memref<16x32xf32, #tpu.memory_space<vmem>>, %arg4: memref<16x32xf32, #tpu.memory_space<vmem>>, %arg5: memref<32x32xf32, #tpu.memory_space<vmem>>, %arg6: memref<32x32xf32, #tpu.memory_space<vmem>>, %arg7: memref<32x32xf32, #tpu.memory_space<vmem>>, %arg8: memref<16x32xf32, #tpu.memory_space<vmem>>, %arg9: memref<16x32xf32, #tpu.memory_space<vmem>>, %arg10: memref<16x32xbf16, #tpu.memory_space<vmem>>) attributes {dimension_semantics = [#tpu.dimension_semantics<parallel>, #tpu.dimension_semantics<parallel>], iteration_bounds = array<i64: 1, 1>, scalar_prefetch = 0 : i64, scratch_operands = 0 : i64, tpu.core_type = #tpu.core_type<tc>, window_params = [{transform_indices = @transform_0, window_bounds = array<i64: 16, 32>}, {transform_indices = @transform_1, window_bounds = array<i64: 16, 32>}, {transform_indices = @transform_2, window_bounds = array<i64: 16, 32>}, {transform_indices = @transform_3, window_bounds = array<i64: 32, 32>}, {transform_indices = @transform_4, window_bounds = array<i64: 32, 32>}, {transform_indices = @transform_5, window_bounds = array<i64: 32, 32>}, {transform_indices = @transform_6, window_bounds = array<i64: 16, 32>}, {transform_indices = @transform_7, window_bounds = array<i64: 16, 32>}, {transform_indices = @transform_8, window_bounds = array<i64: 16, 32>}]} {
    %c0 = arith.constant 0 : index
    %c0_0 = arith.constant 0 : index
    %0 = vector.load %arg2[%c0, %c0_0] : memref<16x32xf32, #tpu.memory_space<vmem>>, vector<16x32xf32>
    %c0_1 = arith.constant 0 : index
    %c0_2 = arith.constant 0 : index
    %1 = vector.load %arg5[%c0_1, %c0_2] : memref<32x32xf32, #tpu.memory_space<vmem>>, vector<32x32xf32>
    %cst = arith.constant dense<0.000000e+00> : vector<16x32xf32>
    %2 = tpu.matmul %0, %1, %cst {dimension_numbers = #tpu.dot_dimension_numbers<[1], [0], [0], [1], [0, 0, 1, 1], [], []>} : vector<16x32xf32>, vector<32x32xf32>, vector<16x32xf32> -> vector<16x32xf32>
    %c0_3 = arith.constant 0 : index
    %c0_4 = arith.constant 0 : index
    %3 = vector.load %arg8[%c0_3, %c0_4] : memref<16x32xf32, #tpu.memory_space<vmem>>, vector<16x32xf32>
    tpu.vector_store %arg8[%c0_3, %c0_4], %2 {strides = array<i32>} : memref<16x32xf32, #tpu.memory_space<vmem>>, vector<16x32xf32>,
    %c0_5 = arith.constant 0 : index
    %c0_6 = arith.constant 0 : index
    %4 = vector.load %arg3[%c0_5, %c0_6] : memref<16x32xf32, #tpu.memory_space<vmem>>, vector<16x32xf32>
    %c0_7 = arith.constant 0 : index
    %c0_8 = arith.constant 0 : index
    %5 = vector.load %arg6[%c0_7, %c0_8] : memref<32x32xf32, #tpu.memory_space<vmem>>, vector<32x32xf32>
    %cst_9 = arith.constant dense<0.000000e+00> : vector<16x32xf32>
    %6 = tpu.matmul %4, %5, %cst_9 {dimension_numbers = #tpu.dot_dimension_numbers<[1], [0], [0], [1], [0, 0, 1, 1], [], []>} : vector<16x32xf32>, vector<32x32xf32>, vector<16x32xf32> -> vector<16x32xf32>
    %c0_10 = arith.constant 0 : index
    %c0_11 = arith.constant 0 : index
    %7 = vector.load %arg9[%c0_10, %c0_11] : memref<16x32xf32, #tpu.memory_space<vmem>>, vector<16x32xf32>
    tpu.vector_store %arg9[%c0_10, %c0_11], %6 {strides = array<i32>} : memref<16x32xf32, #tpu.memory_space<vmem>>, vector<16x32xf32>,
    %c0_12 = arith.constant 0 : index
    %c0_13 = arith.constant 0 : index
    %8 = vector.load %arg4[%c0_12, %c0_13] : memref<16x32xf32, #tpu.memory_space<vmem>>, vector<16x32xf32>
    %c0_14 = arith.constant 0 : index
    %c0_15 = arith.constant 0 : index
    %9 = vector.load %arg7[%c0_14, %c0_15] : memref<32x32xf32, #tpu.memory_space<vmem>>, vector<32x32xf32>
    %cst_16 = arith.constant dense<0.000000e+00> : vector<16x32xf32>
    %10 = tpu.matmul %8, %9, %cst_16 {dimension_numbers = #tpu.dot_dimension_numbers<[1], [0], [0], [1], [0, 0, 1, 1], [], []>} : vector<16x32xf32>, vector<32x32xf32>, vector<16x32xf32> -> vector<16x32xf32>
    %11 = arith.truncf %10 : vector<16x32xf32> to vector<16x32xbf16>
    %c0_17 = arith.constant 0 : index
    %c0_18 = arith.constant 0 : index
    %12 = vector.load %arg10[%c0_17, %c0_18] : memref<16x32xbf16, #tpu.memory_space<vmem>>, vector<16x32xbf16>
    tpu.vector_store %arg10[%c0_17, %c0_18], %11 {strides = array<i32>} : memref<16x32xbf16, #tpu.memory_space<vmem>>, vector<16x32xbf16>,
    return
  }
  func.func @transform_0(%arg0: i32, %arg1: i32) -> (i32, i32) {
    %c0_i32 = arith.constant 0 : i32
    %c0_i32_0 = arith.constant 0 : i32
    return %arg0, %c0_i32 : i32, i32
  }
  func.func @transform_1(%arg0: i32, %arg1: i32) -> (i32, i32) {
    %c0_i32 = arith.constant 0 : i32
    %c0_i32_0 = arith.constant 0 : i32
    return %arg0, %c0_i32 : i32, i32
  }
  func.func @transform_2(%arg0: i32, %arg1: i32) -> (i32, i32) {
    %c0_i32 = arith.constant 0 : i32
    %c0_i32_0 = arith.constant 0 : i32
    return %arg0, %c0_i32 : i32, i32
  }
  func.func @transform_3(%arg0: i32, %arg1: i32) -> (i32, i32) {
    %c0_i32 = arith.constant 0 : i32
    %c0_i32_0 = arith.constant 0 : i32
    return %c0_i32, %arg1 : i32, i32
  }
  func.func @transform_4(%arg0: i32, %arg1: i32) -> (i32, i32) {
    %c0_i32 = arith.constant 0 : i32
    %c0_i32_0 = arith.constant 0 : i32
    return %c0_i32, %arg1 : i32, i32
  }
  func.func @transform_5(%arg0: i32, %arg1: i32) -> (i32, i32) {
    %c0_i32 = arith.constant 0 : i32
    %c0_i32_0 = arith.constant 0 : i32
    return %c0_i32, %arg1 : i32, i32
  }
  func.func @transform_6(%arg0: i32, %arg1: i32) -> (i32, i32) {
    %c0_i32 = arith.constant 0 : i32
    return %arg0, %arg1 : i32, i32
  }
  func.func @transform_7(%arg0: i32, %arg1: i32) -> (i32, i32) {
    %c0_i32 = arith.constant 0 : i32
    return %arg0, %arg1 : i32, i32
  }
  func.func @transform_8(%arg0: i32, %arg1: i32) -> (i32, i32) {
    %c0_i32 = arith.constant 0 : i32
    return %arg0, %arg1 : i32, i32
  }
}

</mosaic_0001>

<llo_original>
// kernel: tpu_custom_call.1
$region0: #{tpu_custom_call.1}
  #allocation0 [shape = 'u32[]', space=smem, size = 0x4, offset = 0x4, fixed_abs, tag = 'smem constant byte address 0x4 - core index']
  #allocation1 [shape = 'u32[144,128]{1,0:T(1,128)}', space=vmem, size = 0x12000, scoped, tag = 'internal scratch']
  %s0 = inlined_call_operand.hbm [shape: f32[16,32], index: 0, kind: input, shape index: {}]
  %s1 = inlined_call_operand.hbm [shape: f32[16,32], index: 1, kind: input, shape index: {}]
  %s2 = inlined_call_operand.hbm [shape: f32[16,32], index: 2, kind: input, shape index: {}]
  %s3 = inlined_call_operand.hbm [shape: f32[32,32], index: 3, kind: input, shape index: {}]
  %s4 = inlined_call_operand.hbm [shape: f32[32,32], index: 4, kind: input, shape index: {}]
  %s5 = inlined_call_operand.hbm [shape: f32[32,32], index: 5, kind: input, shape index: {}]
  %s6 = inlined_call_operand.hbm [shape: f32[16,32], index: 6, kind: output, shape index: {0}]
  %s7 = inlined_call_operand.hbm [shape: f32[16,32], index: 7, kind: output, shape index: {1}]
  %s8 = inlined_call_operand.hbm [shape: bf16[16,32], index: 8, kind: output, shape index: {2}]
  %9 = xla_tuple %s6, %s7, %s8
  %s10 = sld [smem:[#allocation0]]
  $region74: #{tpu_custom_call.1} parent=0
    _
  %s12 = ssub.s32 1, %s10
  %s13 = scalar_select 0, %s12, %s10
  $region1: #{tpu_custom_call.1} parent=0
    #allocation2 [shape = 'u8[8192]{0}', space=vmem, size = 0x2000, scoped, tag = 'input window, operand 0, single buffered']
    #allocation3 [shape = 's32[1]{0}', space=sflag, size = 0x4, scoped, tag = 'scoped memory for tpu_custom_call.1']
    #allocation4 [shape = 's32[1]{0}', space=sflag, size = 0x4, scoped, tag = 'scoped memory for tpu_custom_call.1']
    #allocation5 [shape = 'u8[8192]{0}', space=vmem, size = 0x2000, scoped, tag = 'input window, operand 1, single buffered']
    #allocation6 [shape = 's32[1]{0}', space=sflag, size = 0x4, scoped, tag = 'scoped memory for tpu_custom_call.1']
    #allocation7 [shape = 'u8[8192]{0}', space=vmem, size = 0x2000, scoped, tag = 'input window, operand 2, single buffered']
    #allocation8 [shape = 'u8[16384]{0}', space=vmem, size = 0x4000, scoped, tag = 'input window, operand 3, single buffered']
    #allocation9 [shape = 's32[1]{0}', space=sflag, size = 0x4, scoped, tag = 'scoped memory for tpu_custom_call.1']
    #allocation10 [shape = 'u8[16384]{0}', space=vmem, size = 0x4000, scoped, tag = 'input window, operand 4, single buffered']
    #allocation11 [shape = 'u8[16384]{0}', space=vmem, size = 0x4000, scoped, tag = 'input window, operand 5, single buffered']
    #allocation12 [shape = 's32[1]{0}', space=sflag, size = 0x4, scoped, tag = 'scoped memory for tpu_custom_call.1']
    #allocation13 [shape = 'u8[8192]{0}', space=vmem, size = 0x2000, scoped, tag = 'output window, operand 0, single buffered']
    #allocation14 [shape = 'u8[8192]{0}', space=vmem, size = 0x2000, scoped, tag = 'output window, operand 1, single buffered']
    #allocation15 [shape = 's32[1]{0}', space=sflag, size = 0x4, scoped, tag = 'scoped memory for tpu_custom_call.1']
    #allocation16 [shape = 'u8[4096]{0}', space=vmem, size = 0x1000, scoped, tag = 'output window, operand 2, single buffered']
    %14 = vsyncpa [#allocation3], 0
    %15 = vsyncpa [#allocation6], 0
    %16 = vsyncpa [#allocation9], 0
    %17 = vsyncpa [#allocation12], 0
    %18 = vsyncpa [#allocation4], 0
    %19 = vsyncpa [#allocation15], 0
    // Predicated region
    $region2: #{tpu_custom_call.1} parent=1 // pred_check
      _
    $region3: #{tpu_custom_call.1} parent=1 // pred_check_branch
      %21 = sbr.rel (0) target = $region5
    $region4: #{tpu_custom_call.1} parent=1 // pred_region
      %s23 = ssub.s32 256, 256
      %24 = vsyncadd [#allocation3], %s23
      %s25 = sshll.u32 [#allocation2], 4
      %s26 = int_to_ptr.vmem [resolvable:$true] %s25
      %31 = dma.hbm_to_vmem [thread:$0]  %s0, 256, %s26, [#allocation3], 128, 128, 8
    $region5: #{tpu_custom_call.1} parent=1 // pred_fallthru
      _
    // Predicated region
    $region6: #{tpu_custom_call.1} parent=1 // pred_check
      _
    $region7: #{tpu_custom_call.1} parent=1 // pred_check_branch
      %33 = sbr.rel (0) target = $region9
    $region8: #{tpu_custom_call.1} parent=1 // pred_region
      %s35 = ssub.s32 256, 256
      %36 = vsyncadd [#allocation6], %s35
      %s37 = sshll.u32 [#allocation5], 4
      %s38 = int_to_ptr.vmem [resolvable:$true] %s37
      %43 = dma.hbm_to_vmem [thread:$0]  %s1, 256, %s38, [#allocation6], 128, 128, 8
    $region9: #{tpu_custom_call.1} parent=1 // pred_fallthru
      _
    // Predicated region
    $region10: #{tpu_custom_call.1} parent=1 // pred_check
      _
    $region11: #{tpu_custom_call.1} parent=1 // pred_check_branch
      %45 = sbr.rel (0) target = $region13
    $region12: #{tpu_custom_call.1} parent=1 // pred_region
      %s47 = ssub.s32 256, 256
      %48 = vsyncadd [#allocation6], %s47
      %s49 = sshll.u32 [#allocation7], 4
      %s50 = int_to_ptr.vmem [resolvable:$true] %s49
      %55 = dma.hbm_to_vmem [thread:$0]  %s2, 256, %s50, [#allocation6], 128, 128, 8
    $region13: #{tpu_custom_call.1} parent=1 // pred_fallthru
      _
    // Predicated region
    $region14: #{tpu_custom_call.1} parent=1 // pred_check
      _
    $region15: #{tpu_custom_call.1} parent=1 // pred_check_branch
      %57 = sbr.rel (0) target = $region17
    $region16: #{tpu_custom_call.1} parent=1 // pred_region
      %s59 = ssub.s32 512, 512
      %60 = vsyncadd [#allocation9], %s59
      %s61 = sshll.u32 [#allocation8], 4
      %s62 = int_to_ptr.vmem [resolvable:$true] %s61
      %67 = dma.hbm_to_vmem [thread:$0]  %s3, 512, %s62, [#allocation9], 128, 128, 8
    $region17: #{tpu_custom_call.1} parent=1 // pred_fallthru
      _
    // Predicated region
    $region18: #{tpu_custom_call.1} parent=1 // pred_check
      _
    $region19: #{tpu_custom_call.1} parent=1 // pred_check_branch
      %69 = sbr.rel (0) target = $region21
    $region20: #{tpu_custom_call.1} parent=1 // pred_region
      %s71 = ssub.s32 512, 512
      %72 = vsyncadd [#allocation9], %s71
      %s73 = sshll.u32 [#allocation10], 4
      %s74 = int_to_ptr.vmem [resolvable:$true] %s73
      %79 = dma.hbm_to_vmem [thread:$0]  %s4, 512, %s74, [#allocation9], 128, 128, 8
    $region21: #{tpu_custom_call.1} parent=1 // pred_fallthru
      _
    // Predicated region
    $region22: #{tpu_custom_call.1} parent=1 // pred_check
      _
    $region23: #{tpu_custom_call.1} parent=1 // pred_check_branch
      %81 = sbr.rel (0) target = $region25
    $region24: #{tpu_custom_call.1} parent=1 // pred_region
      %s83 = ssub.s32 512, 512
      %84 = vsyncadd [#allocation12], %s83
      %s85 = sshll.u32 [#allocation11], 4
      %s86 = int_to_ptr.vmem [resolvable:$true] %s85
      %91 = dma.hbm_to_vmem [thread:$0]  %s5, 512, %s86, [#allocation12], 128, 128, 8
    $region25: #{tpu_custom_call.1} parent=1 // pred_fallthru
      _
    // Predicated region
    $region26: #{tpu_custom_call.1} parent=1 // pred_check
      _
    $region27: #{tpu_custom_call.1} parent=1 // pred_check_branch
      %93 = sbr.rel (0) target = $region29
    $region28: #{tpu_custom_call.1} parent=1 // pred_region
      %94 = dma.done [#allocation3], 256
    $region29: #{tpu_custom_call.1} parent=1 // pred_fallthru
      _
    // Predicated region
    $region30: #{tpu_custom_call.1} parent=1 // pred_check
      _
    $region31: #{tpu_custom_call.1} parent=1 // pred_check_branch
      %96 = sbr.rel (0) target = $region33
    $region32: #{tpu_custom_call.1} parent=1 // pred_region
      %97 = dma.done [#allocation6], 256
    $region33: #{tpu_custom_call.1} parent=1 // pred_fallthru
      _
    // Predicated region
    $region34: #{tpu_custom_call.1} parent=1 // pred_check
      _
    $region35: #{tpu_custom_call.1} parent=1 // pred_check_branch
      %99 = sbr.rel (0) target = $region37
    $region36: #{tpu_custom_call.1} parent=1 // pred_region
      %100 = dma.done [#allocation6], 256
    $region37: #{tpu_custom_call.1} parent=1 // pred_fallthru
      _
    // Predicated region
    $region38: #{tpu_custom_call.1} parent=1 // pred_check
      _
    $region39: #{tpu_custom_call.1} parent=1 // pred_check_branch
      %102 = sbr.rel (0) target = $region41
    $region40: #{tpu_custom_call.1} parent=1 // pred_region
      %103 = dma.done [#allocation9], 512
    $region41: #{tpu_custom_call.1} parent=1 // pred_fallthru
      _
    // Predicated region
    $region42: #{tpu_custom_call.1} parent=1 // pred_check
      _
    $region43: #{tpu_custom_call.1} parent=1 // pred_check_branch
      %105 = sbr.rel (0) target = $region45
    $region44: #{tpu_custom_call.1} parent=1 // pred_region
      %106 = dma.done [#allocation9], 512
    $region45: #{tpu_custom_call.1} parent=1 // pred_fallthru
      _
    // Predicated region
    $region46: #{tpu_custom_call.1} parent=1 // pred_check
      _
    $region47: #{tpu_custom_call.1} parent=1 // pred_check_branch
      %108 = sbr.rel (0) target = $region49
    $region48: #{tpu_custom_call.1} parent=1 // pred_region
      %109 = dma.done [#allocation12], 512
    $region49: #{tpu_custom_call.1} parent=1 // pred_fallthru
      _
    %v110 = vld [vmem:[#allocation2] sm:$0xff]
    %v111 = vld [vmem:[#allocation2 + $0x8] sm:$0xff]
    %v112 = vld [vmem:[#allocation8] sm:$0xff]
    %v113 = vld [vmem:[#allocation8 + $0x8] sm:$0xff]
    %v114 = vld [vmem:[#allocation8 + $0x10] sm:$0xff]
    %v115 = vld [vmem:[#allocation8 + $0x18] sm:$0xff]
    %vm116 = vcmask 261120
    %v118 = vsel %vm116, %v110, 0
    %v121 = vsel %vm116, %v111, 0
    %123 = vmatprep.subr.mxu0 0.0
    %124 = vmatpush1.msra.mxu0 %v112
    %125 = vmatprep.subr.mxu0 0.0
    %126 = vmatpush1.msra.mxu0 %v113
    %127 = vmatprep.subr.mxu0 0.0
    %128 = vmatpush1.msra.mxu0 %v114
    %129 = vmatprep.subr.mxu0 0.0
    %130 = vmatpush1.msra.mxu0 %v115
    %131 = vmatprep.subr.mxu0 0.0
    %132 = vmatpush1.msra.mxu0 0.0
    %133 = vmatprep.subr.mxu0 0.0
    %134 = vmatpush1.msra.mxu0 0.0
    %135 = vmatprep.subr.mxu0 0.0
    %136 = vmatpush1.msra.mxu0 0.0
    %137 = vmatprep.subr.mxu0 0.0
    %138 = vmatpush1.msra.mxu0 0.0
    %139 = vmatprep.subr.mxu0 0.0
    %140 = vmatpush1.msra.mxu0 0.0
    %141 = vmatprep.subr.mxu0 0.0
    %142 = vmatpush1.msra.mxu0 0.0
    %143 = vmatprep.subr.mxu0 0.0
    %144 = vmatpush1.msra.mxu0 0.0
    %145 = vmatprep.subr.mxu0 0.0
    %146 = vmatpush1.msra.mxu0 0.0
    %147 = vmatprep.subr.mxu0 0.0
    %148 = vmatpush1.msra.mxu0 0.0
    %149 = vmatprep.subr.mxu0 0.0
    %150 = vmatpush1.msra.mxu0 0.0
    %151 = vmatprep.subr.mxu0 0.0
    %152 = vmatpush1.msra.mxu0 0.0
    %153 = vmatprep.subr.mxu0 0.0
    %154 = vmatpush1.msra.mxu0 0.0
    %155 = vmatprep.subr.mxu0 0.0
    %156 = vmatpush1.msra.mxu0 0.0
    %157 = vmatprep.subr.mxu0 0.0
    %158 = vmatpush1.msra.mxu0 0.0
    %159 = vmatprep.subr.mxu0 0.0
    %160 = vmatpush1.msra.mxu0 0.0
    %161 = vmatprep.subr.mxu0 0.0
    %162 = vmatpush1.msra.mxu0 0.0
    %163 = vmatprep.subr.mxu0 0.0
    %164 = vmatpush1.msra.mxu0 0.0
    %165 = vmatprep.subr.mxu0 0.0
    %166 = vmatpush1.msra.mxu0 0.0
    %167 = vmatprep.subr.mxu0 0.0
    %168 = vmatpush1.msra.mxu0 0.0
    %169 = vmatprep.subr.mxu0 0.0
    %170 = vmatpush1.msra.mxu0 0.0
    %171 = vmatprep.subr.mxu0 0.0
    %172 = vmatpush1.msra.mxu0 0.0
    %173 = vmatprep.subr.mxu0 0.0
    %174 = vmatpush1.msra.mxu0 0.0
    %175 = vmatprep.subr.mxu0 0.0
    %176 = vmatpush1.msra.mxu0 0.0
    %177 = vmatprep.subr.mxu0 0.0
    %178 = vmatpush1.msra.mxu0 0.0
    %179 = vmatprep.subr.mxu0 0.0
    %180 = vmatpush1.msra.mxu0 0.0
    %181 = vmatprep.subr.mxu0 0.0
    %182 = vmatpush1.msra.mxu0 0.0
    %183 = vmatprep.subr.mxu0 0.0
    %184 = vmatpush1.msra.mxu0 0.0
    %185 = vmatprep.subr.mxu0 0.0
    %186 = vmatpush1.msra.mxu0 0.0
    %187 = vmatprep.mubr.f32.mxu0 0.0
    %188 = vmatmul.mubr.f32.gmra.mrb[0].mxu0 %v118
    %v189 = vpop.f32.mrb[0].mxu0
    %v190 = vadd.f32 0.0, %v189
    %v191 = vpop.f32.mrb[0].mxu0
    %192 = vmatprep.mubr.f32.mxu0 0.0
    %193 = vmatmul.mubr.f32.gmra.mrb[0].mxu0 %v121
    %v194 = vpop.f32.mrb[0].mxu0
    %v195 = vadd.f32 0.0, %v194
    %v196 = vpop.f32.mrb[0].mxu0
    %197 = vdwg.mxu0
    %198 = vst.msk [vmem:[#allocation13] sm:$0xff] %vm116, %v190
    %199 = vst.msk [vmem:[#allocation13 + $0x8] sm:$0xff] %vm116, %v195
    %v200 = vld [vmem:[#allocation5] sm:$0xff]
    %v201 = vld [vmem:[#allocation5 + $0x8] sm:$0xff]
    %v202 = vld [vmem:[#allocation10] sm:$0xff]
    %v203 = vld [vmem:[#allocation10 + $0x8] sm:$0xff]
    %v204 = vld [vmem:[#allocation10 + $0x10] sm:$0xff]
    %v205 = vld [vmem:[#allocation10 + $0x18] sm:$0xff]
    %v207 = vsel %vm116, %v200, 0
    %v210 = vsel %vm116, %v201, 0
    %212 = vmatprep.subr.mxu0 0.0
    %213 = vmatpush1.msra.mxu0 %v202
    %214 = vmatprep.subr.mxu0 0.0
    %215 = vmatpush1.msra.mxu0 %v203
    %216 = vmatprep.subr.mxu0 0.0
    %217 = vmatpush1.msra.mxu0 %v204
    %218 = vmatprep.subr.mxu0 0.0
    %219 = vmatpush1.msra.mxu0 %v205
    %220 = vmatprep.subr.mxu0 0.0
    %221 = vmatpush1.msra.mxu0 0.0
    %222 = vmatprep.subr.mxu0 0.0
    %223 = vmatpush1.msra.mxu0 0.0
    %224 = vmatprep.subr.mxu0 0.0
    %225 = vmatpush1.msra.mxu0 0.0
    %226 = vmatprep.subr.mxu0 0.0
    %227 = vmatpush1.msra.mxu0 0.0
    %228 = vmatprep.subr.mxu0 0.0
    %229 = vmatpush1.msra.mxu0 0.0
    %230 = vmatprep.subr.mxu0 0.0
    %231 = vmatpush1.msra.mxu0 0.0
    %232 = vmatprep.subr.mxu0 0.0
    %233 = vmatpush1.msra.mxu0 0.0
    %234 = vmatprep.subr.mxu0 0.0
    %235 = vmatpush1.msra.mxu0 0.0
    %236 = vmatprep.subr.mxu0 0.0
    %237 = vmatpush1.msra.mxu0 0.0
    %238 = vmatprep.subr.mxu0 0.0
    %239 = vmatpush1.msra.mxu0 0.0
    %240 = vmatprep.subr.mxu0 0.0
    %241 = vmatpush1.msra.mxu0 0.0
    %242 = vmatprep.subr.mxu0 0.0
    %243 = vmatpush1.msra.mxu0 0.0
    %244 = vmatprep.subr.mxu0 0.0
    %245 = vmatpush1.msra.mxu0 0.0
    %246 = vmatprep.subr.mxu0 0.0
    %247 = vmatpush1.msra.mxu0 0.0
    %248 = vmatprep.subr.mxu0 0.0
    %249 = vmatpush1.msra.mxu0 0.0
    %250 = vmatprep.subr.mxu0 0.0
    %251 = vmatpush1.msra.mxu0 0.0
    %252 = vmatprep.subr.mxu0 0.0
    %253 = vmatpush1.msra.mxu0 0.0
    %254 = vmatprep.subr.mxu0 0.0
    %255 = vmatpush1.msra.mxu0 0.0
    %256 = vmatprep.subr.mxu0 0.0
    %257 = vmatpush1.msra.mxu0 0.0
    %258 = vmatprep.subr.mxu0 0.0
    %259 = vmatpush1.msra.mxu0 0.0
    %260 = vmatprep.subr.mxu0 0.0
    %261 = vmatpush1.msra.mxu0 0.0
    %262 = vmatprep.subr.mxu0 0.0
    %263 = vmatpush1.msra.mxu0 0.0
    %264 = vmatprep.subr.mxu0 0.0
    %265 = vmatpush1.msra.mxu0 0.0
    %266 = vmatprep.subr.mxu0 0.0
    %267 = vmatpush1.msra.mxu0 0.0
    %268 = vmatprep.subr.mxu0 0.0
    %269 = vmatpush1.msra.mxu0 0.0
    %270 = vmatprep.subr.mxu0 0.0
    %271 = vmatpush1.msra.mxu0 0.0
    %272 = vmatprep.subr.mxu0 0.0
    %273 = vmatpush1.msra.mxu0 0.0
    %274 = vmatprep.subr.mxu0 0.0
    %275 = vmatpush1.msra.mxu0 0.0
    %276 = vmatprep.mubr.f32.mxu0 0.0
    %277 = vmatmul.mubr.f32.gmra.mrb[0].mxu0 %v207
    %v278 = vpop.f32.mrb[0].mxu0
    %v279 = vadd.f32 0.0, %v278
    %v280 = vpop.f32.mrb[0].mxu0
    %281 = vmatprep.mubr.f32.mxu0 0.0
    %282 = vmatmul.mubr.f32.gmra.mrb[0].mxu0 %v210
    %v283 = vpop.f32.mrb[0].mxu0
    %v284 = vadd.f32 0.0, %v283
    %v285 = vpop.f32.mrb[0].mxu0
    %286 = vdwg.mxu0
    %287 = vst.msk [vmem:[#allocation14] sm:$0xff] %vm116, %v279
    %288 = vst.msk [vmem:[#allocation14 + $0x8] sm:$0xff] %vm116, %v284
    %v289 = vld [vmem:[#allocation7] sm:$0xff]
    %v290 = vld [vmem:[#allocation7 + $0x8] sm:$0xff]
    %v291 = vld [vmem:[#allocation11] sm:$0xff]
    %v292 = vld [vmem:[#allocation11 + $0x8] sm:$0xff]
    %v293 = vld [vmem:[#allocation11 + $0x10] sm:$0xff]
    %v294 = vld [vmem:[#allocation11 + $0x18] sm:$0xff]
    %v296 = vsel %vm116, %v289, 0
    %v299 = vsel %vm116, %v290, 0
    %301 = vmatprep.subr.mxu0 0.0
    %302 = vmatpush1.msra.mxu0 %v291
    %303 = vmatprep.subr.mxu0 0.0
    %304 = vmatpush1.msra.mxu0 %v292
    %305 = vmatprep.subr.mxu0 0.0
    %306 = vmatpush1.msra.mxu0 %v293
    %307 = vmatprep.subr.mxu0 0.0
    %308 = vmatpush1.msra.mxu0 %v294
    %309 = vmatprep.subr.mxu0 0.0
    %310 = vmatpush1.msra.mxu0 0.0
    %311 = vmatprep.subr.mxu0 0.0
    %312 = vmatpush1.msra.mxu0 0.0
    %313 = vmatprep.subr.mxu0 0.0
    %314 = vmatpush1.msra.mxu0 0.0
    %315 = vmatprep.subr.mxu0 0.0
    %316 = vmatpush1.msra.mxu0 0.0
    %317 = vmatprep.subr.mxu0 0.0
    %318 = vmatpush1.msra.mxu0 0.0
    %319 = vmatprep.subr.mxu0 0.0
    %320 = vmatpush1.msra.mxu0 0.0
    %321 = vmatprep.subr.mxu0 0.0
    %322 = vmatpush1.msra.mxu0 0.0
    %323 = vmatprep.subr.mxu0 0.0
    %324 = vmatpush1.msra.mxu0 0.0
    %325 = vmatprep.subr.mxu0 0.0
    %326 = vmatpush1.msra.mxu0 0.0
    %327 = vmatprep.subr.mxu0 0.0
    %328 = vmatpush1.msra.mxu0 0.0
    %329 = vmatprep.subr.mxu0 0.0
    %330 = vmatpush1.msra.mxu0 0.0
    %331 = vmatprep.subr.mxu0 0.0
    %332 = vmatpush1.msra.mxu0 0.0
    %333 = vmatprep.subr.mxu0 0.0
    %334 = vmatpush1.msra.mxu0 0.0
    %335 = vmatprep.subr.mxu0 0.0
    %336 = vmatpush1.msra.mxu0 0.0
    %337 = vmatprep.subr.mxu0 0.0
    %338 = vmatpush1.msra.mxu0 0.0
    %339 = vmatprep.subr.mxu0 0.0
    %340 = vmatpush1.msra.mxu0 0.0
    %341 = vmatprep.subr.mxu0 0.0
    %342 = vmatpush1.msra.mxu0 0.0
    %343 = vmatprep.subr.mxu0 0.0
    %344 = vmatpush1.msra.mxu0 0.0
    %345 = vmatprep.subr.mxu0 0.0
    %346 = vmatpush1.msra.mxu0 0.0
    %347 = vmatprep.subr.mxu0 0.0
    %348 = vmatpush1.msra.mxu0 0.0
    %349 = vmatprep.subr.mxu0 0.0
    %350 = vmatpush1.msra.mxu0 0.0
    %351 = vmatprep.subr.mxu0 0.0
    %352 = vmatpush1.msra.mxu0 0.0
    %353 = vmatprep.subr.mxu0 0.0
    %354 = vmatpush1.msra.mxu0 0.0
    %355 = vmatprep.subr.mxu0 0.0
    %356 = vmatpush1.msra.mxu0 0.0
    %357 = vmatprep.subr.mxu0 0.0
    %358 = vmatpush1.msra.mxu0 0.0
    %359 = vmatprep.subr.mxu0 0.0
    %360 = vmatpush1.msra.mxu0 0.0
    %361 = vmatprep.subr.mxu0 0.0
    %362 = vmatpush1.msra.mxu0 0.0
    %363 = vmatprep.subr.mxu0 0.0
    %364 = vmatpush1.msra.mxu0 0.0
    %365 = vmatprep.mubr.f32.mxu0 0.0
    %366 = vmatmul.mubr.f32.gmra.mrb[0].mxu0 %v296
    %v367 = vpop.f32.mrb[0].mxu0
    %v368 = vadd.f32 0.0, %v367
    %v369 = vpop.f32.mrb[0].mxu0
    %370 = vmatprep.mubr.f32.mxu0 0.0
    %371 = vmatmul.mubr.f32.gmra.mrb[0].mxu0 %v299
    %v372 = vpop.f32.mrb[0].mxu0
    %v373 = vadd.f32 0.0, %v372
    %v374 = vpop.f32.mrb[0].mxu0
    %375 = vdwg.mxu0
    %v376 = vpack.c.bf16 %v373, %v368
    %v378 = vunpack.c.l.b16 %v376
    %v379 = vunpack.c.h.b16 %v376
    %v380 = vpack.c.b16 %v378, %v378
    %v381 = vpack.c.b16 %v379, %v379
    %vm384 = vcmask 257024
    %385 = vst.msk [vmem:[#allocation16] sm:$0xf] %vm384, %v380
    %386 = vst.msk [vmem:[#allocation16 + $0x4] sm:$0xf] %vm384, %v381
    // Predicated region
    $region50: #{tpu_custom_call.1} parent=1 // pred_check
      _
    $region51: #{tpu_custom_call.1} parent=1 // pred_check_branch
      %388 = sbr.rel (0) target = $region53
    $region52: #{tpu_custom_call.1} parent=1 // pred_region
      %s390 = ssub.s32 256, 256
      %391 = vsyncadd [#allocation4], %s390
      %s392 = sshll.u32 [#allocation13], 4
      %s393 = int_to_ptr.vmem [resolvable:$true] %s392
      %398 = dma.vmem_to_hbm [thread:$0]  %s393, 256, %s6, [#allocation4], 128, 128, 8
    $region53: #{tpu_custom_call.1} parent=1 // pred_fallthru
      _
    // Predicated region
    $region54: #{tpu_custom_call.1} parent=1 // pred_check
      _
    $region55: #{tpu_custom_call.1} parent=1 // pred_check_branch
      %400 = sbr.rel (0) target = $region57
    $region56: #{tpu_custom_call.1} parent=1 // pred_region
      %s402 = ssub.s32 256, 256
      %403 = vsyncadd [#allocation15], %s402
      %s404 = sshll.u32 [#allocation14], 4
      %s405 = int_to_ptr.vmem [resolvable:$true] %s404
      %410 = dma.vmem_to_hbm [thread:$0]  %s405, 256, %s7, [#allocation15], 128, 128, 8
    $region57: #{tpu_custom_call.1} parent=1 // pred_fallthru
      _
    // Predicated region
    $region58: #{tpu_custom_call.1} parent=1 // pred_check
      _
    $region59: #{tpu_custom_call.1} parent=1 // pred_check_branch
      %412 = sbr.rel (0) target = $region61
    $region60: #{tpu_custom_call.1} parent=1 // pred_region
      %s414 = ssub.s32 128, 128
      %415 = vsyncadd [#allocation15], %s414
      %s416 = sshll.u32 [#allocation16], 4
      %s417 = int_to_ptr.vmem [resolvable:$true] %s416
      %422 = dma.vmem_to_hbm [thread:$0]  %s417, 128, %s8, [#allocation15], 64, 64, 4
    $region61: #{tpu_custom_call.1} parent=1 // pred_fallthru
      _
    // Predicated region
    $region62: #{tpu_custom_call.1} parent=1 // pred_check
      _
    $region63: #{tpu_custom_call.1} parent=1 // pred_check_branch
      %424 = sbr.rel (0) target = $region65
    $region64: #{tpu_custom_call.1} parent=1 // pred_region
      %425 = dma.done [#allocation4], 256
    $region65: #{tpu_custom_call.1} parent=1 // pred_fallthru
      _
    // Predicated region
    $region66: #{tpu_custom_call.1} parent=1 // pred_check
      _
    $region67: #{tpu_custom_call.1} parent=1 // pred_check_branch
      %427 = sbr.rel (0) target = $region69
    $region68: #{tpu_custom_call.1} parent=1 // pred_region
      %428 = dma.done [#allocation15], 256
    $region69: #{tpu_custom_call.1} parent=1 // pred_fallthru
      _
    // Predicated region
    $region70: #{tpu_custom_call.1} parent=1 // pred_check
      _
    $region71: #{tpu_custom_call.1} parent=1 // pred_check_branch
      %430 = sbr.rel (0) target = $region73
    $region72: #{tpu_custom_call.1} parent=1 // pred_region
      %431 = dma.done [#allocation15], 128
    $region73: #{tpu_custom_call.1} parent=1 // pred_fallthru
      _
    %432 = vsyncpa [#allocation3], 1
    %433 = vsyncpa [#allocation6], 1
    %434 = vsyncpa [#allocation9], 1
    %435 = vsyncpa [#allocation12], 1
    %436 = vsyncpa [#allocation4], 1
    %437 = vsyncpa [#allocation15], 1

</llo_original>
